<compile_context>
chip_gen: v5e
topology: v5e:2x2
jax: 0.10.0
libtpu: 0.0.40
codegen_flags: <defaults>
</compile_context>

<pallas_src>
import functools

import numpy as np
import jax
import jax.numpy as jnp
from jax.experimental import pallas as pl
from jax.experimental.pallas import tpu as pltpu


# ----------------------------------------------------------------------------
# In-kernel helper: im2col for a 3x3 conv with circular-W / zero-H padding,
# operating entirely on spatially-flattened (C, H*W) data (p = h*W + w).
# ----------------------------------------------------------------------------
def _conv3x3_taps(x, width):
    """Returns (9*C, P); row (3*dy+dx)*C + c holds x[c, h+dy-1, (w+dx-1) mod W]
    (zero where h+dy-1 is out of range), i.e. exactly
    F.pad(x, (1,1,0,0), 'circular') followed by Conv2d(..., padding=(1,0))."""
    C, P = x.shape
    W = width
    zero = jnp.zeros_like(x)
    lane = jax.lax.broadcasted_iota(jnp.int32, (1, P), 1)   # flat position p
    col = lane % W                                          # w = p mod W

    def shift_w(b):                 # circular shift inside each row, b = dx-1
        inner = pltpu.roll(x, (-b) % P, 1)            # x[p + b] off-boundary
        wrap = pltpu.roll(x, (b * (W - 1)) % P, 1)    # within-row wraparound
        boundary = (col == 0) if b < 0 else (col == W - 1)
        return jnp.where(boundary, wrap, inner)

    def shift_h(y, a):              # zero-padded row shift, a = dy-1
        if a == 0:
            return y
        shifted = pltpu.roll(y, (-a * W) % P, 1)      # y[p + a*W]
        oob = (lane < W) if a < 0 else (lane >= P - W)
        return jnp.where(oob, zero, shifted)

    xw = {-1: shift_w(-1), 0: x, 1: shift_w(1)}
    taps = [shift_h(xw[dx - 1], dy - 1) for dy in range(3) for dx in range(3)]
    return jnp.concatenate(taps, axis=0)               # (9*C, P)


# ----------------------------------------------------------------------------
# Fused kernel: upsample + pad + concat + (conv3x3 + BN + LeakyReLU) x 2
# ----------------------------------------------------------------------------
def _up_fused_kernel(m_ref, x1_ref, x2_ref, w1_ref, b1_ref, w2_ref, b2_ref,
                     o_ref, *, width):
    # m_ref : (H1*W1, H2*W2)  bilinear-upsample + placement-pad matrix
    # x1_ref: (1, C1, H1*W1)  low-res feature map (flattened spatial)
    # x2_ref: (1, C2, H2*W2)  skip connection     (flattened spatial)
    # w1/b1 : (Cout, 9*(C1+C2)), (Cout, 1)  conv1 with BN(eval) folded in
    # w2/b2 : (Cout, 9*Cout)   , (Cout, 1)  conv2 with BN(eval) folded in
    # o_ref : (1, Cout, H2*W2)

    # 1) bilinear upsample (align_corners=True) + pad to x2's size: one matmul
    x1u = jnp.dot(x1_ref[0], m_ref[...],
                  preferred_element_type=jnp.float32)            # (C1, P)

    # 2) channel concat [x2, x1]
    x = jnp.concatenate([x2_ref[0], x1u], axis=0)                # (C1+C2, P)

    # 3) conv1 (circular W / zero H) + BN + LeakyReLU : single K=9*Cin matmul
    col = _conv3x3_taps(x, width)                                # (72, P)
    y = jnp.dot(w1_ref[...], col,
                preferred_element_type=jnp.float32) + b1_ref[...]
    y = jnp.where(y > 0, y, 0.01 * y)                            # LeakyReLU

    # 4) conv2 + BN + LeakyReLU
    col = _conv3x3_taps(y, width)                                # (36, P)
    y = jnp.dot(w2_ref[...], col,
                preferred_element_type=jnp.float32) + b2_ref[...]
    y = jnp.where(y > 0, y, 0.01 * y)

    # 5) lane-dense store; (Cout, H*W) rows are already NCHW order
    o_ref[0] = y.astype(o_ref.dtype)


# ----------------------------------------------------------------------------
# Host-side constant: bilinear x2 (align_corners=True) upsample + F.pad
# placement, expressed as a single (H1*W1, H2*W2) matrix.
# ----------------------------------------------------------------------------
def _bilinear_pad_matrix(h_in, w_in, h_tgt, w_tgt):
    h_out, w_out = 2 * h_in, 2 * w_in
    dY, dX = h_tgt - h_out, w_tgt - w_out
    assert dY >= 0 and dX >= 0, (dY, dX)
    # TODO(synk): negative diffY/diffX (cropping) is not handled; it cannot
    # occur for the bilinear scale_factor=2 configuration reproduced here.

    def interp(n_in, n_out):
        u = np.zeros((n_out, n_in), np.float32)
        src = np.arange(n_out, dtype=np.float64) * (n_in - 1) / (n_out - 1)
        i0 = np.clip(np.floor(src).astype(np.int64), 0, n_in - 1)
        i1 = np.clip(i0 + 1, 0, n_in - 1)
        frac = (src - i0).astype(np.float32)
        u[np.arange(n_out), i0] += 1.0 - frac
        u[np.arange(n_out), i1] += frac
        return u

    uy = interp(h_in, h_out)                                # (h_out, h_in)
    ux = interp(w_in, w_out)                                # (w_out, w_in)
    m = np.zeros((h_in, w_in, h_tgt, w_tgt), np.float32)
    top, left = dY // 2, dX // 2
    m[:, :, top:top + h_out, left:left + w_out] = np.einsum('oh,pw->hwop', uy, ux)
    return jnp.asarray(m.reshape(h_in * w_in, h_tgt * w_tgt))


# ----------------------------------------------------------------------------
# Wrapper: free HBM-level reshapes in/out, single fused pallas_call
# ----------------------------------------------------------------------------
def up_forward(params, x1_nchw, x2_nchw):
    N, C1, H1, W1 = x1_nchw.shape
    N2, C2, H2, W2 = x2_nchw.shape
    assert N2 == N
    Cout = params["w2"].shape[0]
    P1, P2 = H1 * W1, H2 * W2

    m = _bilinear_pad_matrix(H1, W1, H2, W2)          # compile-time constant

    # free (bitcast-level) reshapes: flatten spatial so blocks are lane-dense
    x1f = x1_nchw.reshape(N, C1, P1)
    x2f = x2_nchw.reshape(N, C2, P2)

    out_flat = pl.pallas_call(
        functools.partial(_up_fused_kernel, width=W2),
        out_shape=jax.ShapeDtypeStruct((N, Cout, P2), jnp.float32),
        grid=(N,),
        in_specs=[
            pl.BlockSpec((P1, P2), lambda n: (0, 0)),
            pl.BlockSpec((1, C1, P1), lambda n: (n, 0, 0)),
            pl.BlockSpec((1, C2, P2), lambda n: (n, 0, 0)),
            pl.BlockSpec(params["w1"].shape, lambda n: (0, 0)),
            pl.BlockSpec(params["b1"].shape, lambda n: (0, 0)),
            pl.BlockSpec(params["w2"].shape, lambda n: (0, 0)),
            pl.BlockSpec(params["b2"].shape, lambda n: (0, 0)),
        ],
        out_specs=pl.BlockSpec((1, Cout, P2), lambda n: (n, 0, 0)),
        compiler_params=pltpu.CompilerParams(
            dimension_semantics=("parallel",)),   # batch across the 2 TCs on v7x
    )(m, x1f, x2f, params["w1"], params["b1"], params["w2"], params["b2"])

    return out_flat.reshape(N, Cout, H2, W2)          # free reshape -> NCHW


# ----------------------------------------------------------------------------
# Deterministic synthetic parameters (Conv2d + BatchNorm2d eval, pre-folded)
# ----------------------------------------------------------------------------
def make_params(key, in_ch, out_ch, eps=1e-5):
    ks = list(jax.random.split(key, 12))

    def conv_bn(kw, kb, kg, kbeta, km, kv, cin, cout):
        wt = jax.random.normal(kw, (cout, cin, 3, 3), jnp.float32) * 0.1
        cb = 0.1 * jax.random.normal(kb, (cout,), jnp.float32)
        gamma = 1.0 + 0.1 * jax.random.normal(kg, (cout,), jnp.float32)
        beta = 0.1 * jax.random.normal(kbeta, (cout,), jnp.float32)
        mean = 0.1 * jax.random.normal(km, (cout,), jnp.float32)
        var = 1.0 + 0.1 * jnp.abs(jax.random.normal(kv, (cout,), jnp.float32))
        scale = gamma / jnp.sqrt(var + eps)
        # (Cout, Cin, 3, 3) -> (Cout, 9*Cin), column = (3*dy + dx)*Cin + ci,
        # with the BN scale folded into the weight and everything else into b.
        w = jnp.transpose(wt, (0, 2, 3, 1)).reshape(cout, 9 * cin)
        w = (w * scale[:, None]).astype(jnp.float32)
        b = (beta + scale * (cb - mean)).reshape(cout, 1).astype(jnp.float32)
        return w, b

    w1, b1 = conv_bn(*ks[0:6], in_ch, out_ch)
    w2, b2 = conv_bn(*ks[6:12], out_ch, out_ch)
    return {"w1": w1, "b1": b1, "w2": w2, "b2": b2}


# ----------------------------------------------------------------------------
if __name__ == "__main__":
    key = jax.random.PRNGKey(0)
    k_x1, k_x2, k_p = jax.random.split(key, 3)

    # up(in_ch=8, out_ch=4): x1 and x2 each carry in_ch // 2 = 4 channels.
    in_ch, out_ch = 8, 4
    x1 = jax.random.normal(k_x1, (2, in_ch // 2, 8, 8), jnp.float32)     # NCHW
    x2 = jax.random.normal(k_x2, (2, in_ch // 2, 16, 16), jnp.float32)   # NCHW

    params = make_params(k_p, in_ch, out_ch)

    fwd = jax.jit(functools.partial(up_forward, params))
    out = fwd(x1, x2)
    jax.block_until_ready(out)

    assert out.shape == (2, out_ch, 16, 16), out.shape
    assert bool(jnp.all(jnp.isfinite(out)))
    print("KERNEL_OK")
</pallas_src>

<mosaic_0001>
module attributes {stable_mosaic.version = 11 : i64} {
  func.func @_up_fused_kernel(%arg0: i32, %arg1: memref<64x256xf32, #tpu.memory_space<vmem>>, %arg2: memref<1x4x64xf32, #tpu.memory_space<vmem>>, %arg3: memref<1x4x256xf32, #tpu.memory_space<vmem>>, %arg4: memref<4x72xf32, #tpu.memory_space<vmem>>, %arg5: memref<4x1xf32, #tpu.memory_space<vmem>>, %arg6: memref<4x36xf32, #tpu.memory_space<vmem>>, %arg7: memref<4x1xf32, #tpu.memory_space<vmem>>, %arg8: memref<1x4x256xf32, #tpu.memory_space<vmem>>) attributes {dimension_semantics = [#tpu.dimension_semantics<parallel>], iteration_bounds = array<i64: 2>, scalar_prefetch = 0 : i64, scratch_operands = 0 : i64, tpu.core_type = #tpu.core_type<tc>, window_params = [{pipeline_mode = #tpu.pipeline_mode<synchronous>, transform_indices = @transform_0, window_bounds = array<i64: 64, 256>}, {transform_indices = @transform_1, window_bounds = array<i64: 1, 4, 64>}, {transform_indices = @transform_2, window_bounds = array<i64: 1, 4, 256>}, {pipeline_mode = #tpu.pipeline_mode<synchronous>, transform_indices = @transform_3, window_bounds = array<i64: 4, 72>}, {pipeline_mode = #tpu.pipeline_mode<synchronous>, transform_indices = @transform_4, window_bounds = array<i64: 4, 1>}, {pipeline_mode = #tpu.pipeline_mode<synchronous>, transform_indices = @transform_5, window_bounds = array<i64: 4, 36>}, {pipeline_mode = #tpu.pipeline_mode<synchronous>, transform_indices = @transform_6, window_bounds = array<i64: 4, 1>}, {transform_indices = @transform_7, window_bounds = array<i64: 1, 4, 256>}]} {
    %c0 = arith.constant 0 : index
    %c0_0 = arith.constant 0 : index
    %c0_1 = arith.constant 0 : index
    %0 = vector.load %arg2[%c0, %c0_0, %c0_1] : memref<1x4x64xf32, #tpu.memory_space<vmem>>, vector<1x4x64xf32>
    %1 = vector.shape_cast %0 : vector<1x4x64xf32> to vector<4x64xf32>
    %c0_2 = arith.constant 0 : index
    %c0_3 = arith.constant 0 : index
    %2 = vector.load %arg1[%c0_2, %c0_3] : memref<64x256xf32, #tpu.memory_space<vmem>>, vector<64x256xf32>
    %cst = arith.constant dense<0.000000e+00> : vector<4x256xf32>
    %3 = tpu.matmul %1, %2, %cst {dimension_numbers = #tpu.dot_dimension_numbers<[1], [0], [0], [1], [0, 0, 1, 1], [], []>} : vector<4x64xf32>, vector<64x256xf32>, vector<4x256xf32> -> vector<4x256xf32>
    %c0_4 = arith.constant 0 : index
    %c0_5 = arith.constant 0 : index
    %c0_6 = arith.constant 0 : index
    %4 = vector.load %arg3[%c0_4, %c0_5, %c0_6] : memref<1x4x256xf32, #tpu.memory_space<vmem>>, vector<1x4x256xf32>
    %5 = vector.shape_cast %4 : vector<1x4x256xf32> to vector<4x256xf32>
    %6 = tpu.concatenate %5, %3 in 0 : vector<4x256xf32>, vector<4x256xf32> -> vector<8x256xf32>
    %cst_7 = arith.constant 0.000000e+00 : f32
    %7 = vector.broadcast %cst_7 : f32 to vector<8x256xf32>
    %8 = tpu.iota {dimensions = array<i32: 1>} : vector<1x256xi32>
    %c16_i32 = arith.constant 16 : i32
    %c0_i32 = arith.constant 0 : i32
    %9 = arith.cmpi eq, %c16_i32, %c0_i32 : i32
    %c1_i32 = arith.constant 1 : i32
    %10 = arith.select %9, %c1_i32, %c16_i32 : i32
    %11 = vector.broadcast %10 : i32 to vector<1x256xi32>
    %12 = arith.remsi %8, %11 : vector<1x256xi32>
    %c0_i32_8 = arith.constant 0 : i32
    %13 = vector.broadcast %c0_i32_8 : i32 to vector<1x256xi32>
    %14 = arith.cmpi ne, %12, %13 : vector<1x256xi32>
    %c0_i32_9 = arith.constant 0 : i32
    %15 = vector.broadcast %c0_i32_9 : i32 to vector<1x256xi32>
    %16 = arith.cmpi slt, %12, %15 : vector<1x256xi32>
    %c0_i32_10 = arith.constant 0 : i32
    %17 = arith.cmpi slt, %10, %c0_i32_10 : i32
    %18 = vector.broadcast %17 : i1 to vector<1x256xi1>
    %19 = vector.broadcast %18 : vector<1x256xi1> to vector<1x256xi1>
    %20 = arith.xori %16, %19 : vector<1x256xi1>
    %21 = arith.andi %20, %14 : vector<1x256xi1>
    %22 = vector.broadcast %10 : i32 to vector<1x256xi32>
    %23 = arith.addi %12, %22 : vector<1x256xi32>
    %24 = arith.select %21, %23, %12 : vector<1x256xi1>, vector<1x256xi32>
    %c1_i32_11 = arith.constant 1 : i32
    %25 = tpu.dynamic_rotate %6 by %c1_i32_11 dim 1 : vector<8x256xf32>, i32 -> vector<8x256xf32>
    %c241_i32 = arith.constant 241 : i32
    %26 = tpu.dynamic_rotate %6 by %c241_i32 dim 1 : vector<8x256xf32>, i32 -> vector<8x256xf32>
    %c0_i32_12 = arith.constant 0 : i32
    %27 = vector.broadcast %c0_i32_12 : i32 to vector<1x256xi32>
    %28 = arith.cmpi eq, %24, %27 : vector<1x256xi32>
    %29 = vector.shape_cast %28 : vector<1x256xi1> to vector<1x256xi1>
    %30 = vector.broadcast %29 : vector<1x256xi1> to vector<8x256xi1>
    %31 = arith.select %30, %26, %25 : vector<8x256xi1>, vector<8x256xf32>
    %c255_i32 = arith.constant 255 : i32
    %32 = tpu.dynamic_rotate %6 by %c255_i32 dim 1 : vector<8x256xf32>, i32 -> vector<8x256xf32>
    %c15_i32 = arith.constant 15 : i32
    %33 = tpu.dynamic_rotate %6 by %c15_i32 dim 1 : vector<8x256xf32>, i32 -> vector<8x256xf32>
    %c15_i32_13 = arith.constant 15 : i32
    %34 = vector.broadcast %c15_i32_13 : i32 to vector<1x256xi32>
    %35 = arith.cmpi eq, %24, %34 : vector<1x256xi32>
    %36 = vector.shape_cast %35 : vector<1x256xi1> to vector<1x256xi1>
    %37 = vector.broadcast %36 : vector<1x256xi1> to vector<8x256xi1>
    %38 = arith.select %37, %33, %32 : vector<8x256xi1>, vector<8x256xf32>
    %c16_i32_14 = arith.constant 16 : i32
    %39 = tpu.dynamic_rotate %31 by %c16_i32_14 dim 1 : vector<8x256xf32>, i32 -> vector<8x256xf32>
    %c16_i32_15 = arith.constant 16 : i32
    %40 = vector.broadcast %c16_i32_15 : i32 to vector<1x256xi32>
    %41 = arith.cmpi slt, %8, %40 : vector<1x256xi32>
    %42 = vector.shape_cast %41 : vector<1x256xi1> to vector<1x256xi1>
    %43 = vector.broadcast %42 : vector<1x256xi1> to vector<8x256xi1>
    %44 = arith.select %43, %7, %39 : vector<8x256xi1>, vector<8x256xf32>
    %c16_i32_16 = arith.constant 16 : i32
    %45 = tpu.dynamic_rotate %6 by %c16_i32_16 dim 1 : vector<8x256xf32>, i32 -> vector<8x256xf32>
    %c16_i32_17 = arith.constant 16 : i32
    %46 = vector.broadcast %c16_i32_17 : i32 to vector<1x256xi32>
    %47 = arith.cmpi slt, %8, %46 : vector<1x256xi32>
    %48 = vector.shape_cast %47 : vector<1x256xi1> to vector<1x256xi1>
    %49 = vector.broadcast %48 : vector<1x256xi1> to vector<8x256xi1>
    %50 = arith.select %49, %7, %45 : vector<8x256xi1>, vector<8x256xf32>
    %c16_i32_18 = arith.constant 16 : i32
    %51 = tpu.dynamic_rotate %38 by %c16_i32_18 dim 1 : vector<8x256xf32>, i32 -> vector<8x256xf32>
    %c16_i32_19 = arith.constant 16 : i32
    %52 = vector.broadcast %c16_i32_19 : i32 to vector<1x256xi32>
    %53 = arith.cmpi slt, %8, %52 : vector<1x256xi32>
    %54 = vector.shape_cast %53 : vector<1x256xi1> to vector<1x256xi1>
    %55 = vector.broadcast %54 : vector<1x256xi1> to vector<8x256xi1>
    %56 = arith.select %55, %7, %51 : vector<8x256xi1>, vector<8x256xf32>
    %c240_i32 = arith.constant 240 : i32
    %57 = tpu.dynamic_rotate %31 by %c240_i32 dim 1 : vector<8x256xf32>, i32 -> vector<8x256xf32>
    %c240_i32_20 = arith.constant 240 : i32
    %58 = vector.broadcast %c240_i32_20 : i32 to vector<1x256xi32>
    %59 = arith.cmpi sge, %8, %58 : vector<1x256xi32>
    %60 = vector.shape_cast %59 : vector<1x256xi1> to vector<1x256xi1>
    %61 = vector.broadcast %60 : vector<1x256xi1> to vector<8x256xi1>
    %62 = arith.select %61, %7, %57 : vector<8x256xi1>, vector<8x256xf32>
    %c240_i32_21 = arith.constant 240 : i32
    %63 = tpu.dynamic_rotate %6 by %c240_i32_21 dim 1 : vector<8x256xf32>, i32 -> vector<8x256xf32>
    %c240_i32_22 = arith.constant 240 : i32
    %64 = vector.broadcast %c240_i32_22 : i32 to vector<1x256xi32>
    %65 = arith.cmpi sge, %8, %64 : vector<1x256xi32>
    %66 = vector.shape_cast %65 : vector<1x256xi1> to vector<1x256xi1>
    %67 = vector.broadcast %66 : vector<1x256xi1> to vector<8x256xi1>
    %68 = arith.select %67, %7, %63 : vector<8x256xi1>, vector<8x256xf32>
    %c240_i32_23 = arith.constant 240 : i32
    %69 = tpu.dynamic_rotate %38 by %c240_i32_23 dim 1 : vector<8x256xf32>, i32 -> vector<8x256xf32>
    %c240_i32_24 = arith.constant 240 : i32
    %70 = vector.broadcast %c240_i32_24 : i32 to vector<1x256xi32>
    %71 = arith.cmpi sge, %8, %70 : vector<1x256xi32>
    %72 = vector.shape_cast %71 : vector<1x256xi1> to vector<1x256xi1>
    %73 = vector.broadcast %72 : vector<1x256xi1> to vector<8x256xi1>
    %74 = arith.select %73, %7, %69 : vector<8x256xi1>, vector<8x256xf32>
    %75 = tpu.concatenate %44, %50, %56, %31, %6, %38, %62, %68, %74 in 0 : vector<8x256xf32>, vector<8x256xf32>, vector<8x256xf32>, vector<8x256xf32>, vector<8x256xf32>, vector<8x256xf32>, vector<8x256xf32>, vector<8x256xf32>, vector<8x256xf32> -> vector<72x256xf32>
    %c0_25 = arith.constant 0 : index
    %c0_26 = arith.constant 0 : index
    %76 = vector.load %arg4[%c0_25, %c0_26] : memref<4x72xf32, #tpu.memory_space<vmem>>, vector<4x72xf32>
    %cst_27 = arith.constant dense<0.000000e+00> : vector<4x256xf32>
    %77 = tpu.matmul %76, %75, %cst_27 {dimension_numbers = #tpu.dot_dimension_numbers<[1], [0], [0], [1], [0, 0, 1, 1], [], []>} : vector<4x72xf32>, vector<72x256xf32>, vector<4x256xf32> -> vector<4x256xf32>
    %c0_28 = arith.constant 0 : index
    %c0_29 = arith.constant 0 : index
    %78 = vector.load %arg5[%c0_28, %c0_29] : memref<4x1xf32, #tpu.memory_space<vmem>>, vector<4x1xf32>
    %79 = vector.broadcast %78 : vector<4x1xf32> to vector<4x256xf32>
    %80 = arith.addf %77, %79 : vector<4x256xf32>
    %cst_30 = arith.constant 0.000000e+00 : f32
    %81 = vector.broadcast %cst_30 : f32 to vector<4x256xf32>
    %82 = arith.cmpf ogt, %80, %81 : vector<4x256xf32>
    %cst_31 = arith.constant 0.00999999977 : f32
    %83 = vector.broadcast %cst_31 : f32 to vector<4x256xf32>
    %84 = arith.mulf %83, %80 : vector<4x256xf32>
    %85 = arith.select %82, %80, %84 : vector<4x256xi1>, vector<4x256xf32>
    %cst_32 = arith.constant 0.000000e+00 : f32
    %86 = vector.broadcast %cst_32 : f32 to vector<4x256xf32>
    %87 = tpu.iota {dimensions = array<i32: 1>} : vector<1x256xi32>
    %c16_i32_33 = arith.constant 16 : i32
    %c0_i32_34 = arith.constant 0 : i32
    %88 = arith.cmpi eq, %c16_i32_33, %c0_i32_34 : i32
    %c1_i32_35 = arith.constant 1 : i32
    %89 = arith.select %88, %c1_i32_35, %c16_i32_33 : i32
    %90 = vector.broadcast %89 : i32 to vector<1x256xi32>
    %91 = arith.remsi %87, %90 : vector<1x256xi32>
    %c0_i32_36 = arith.constant 0 : i32
    %92 = vector.broadcast %c0_i32_36 : i32 to vector<1x256xi32>
    %93 = arith.cmpi ne, %91, %92 : vector<1x256xi32>
    %c0_i32_37 = arith.constant 0 : i32
    %94 = vector.broadcast %c0_i32_37 : i32 to vector<1x256xi32>
    %95 = arith.cmpi slt, %91, %94 : vector<1x256xi32>
    %c0_i32_38 = arith.constant 0 : i32
    %96 = arith.cmpi slt, %89, %c0_i32_38 : i32
    %97 = vector.broadcast %96 : i1 to vector<1x256xi1>
    %98 = vector.broadcast %97 : vector<1x256xi1> to vector<1x256xi1>
    %99 = arith.xori %95, %98 : vector<1x256xi1>
    %100 = arith.andi %99, %93 : vector<1x256xi1>
    %101 = vector.broadcast %89 : i32 to vector<1x256xi32>
    %102 = arith.addi %91, %101 : vector<1x256xi32>
    %103 = arith.select %100, %102, %91 : vector<1x256xi1>, vector<1x256xi32>
    %c1_i32_39 = arith.constant 1 : i32
    %104 = tpu.dynamic_rotate %85 by %c1_i32_39 dim 1 : vector<4x256xf32>, i32 -> vector<4x256xf32>
    %c241_i32_40 = arith.constant 241 : i32
    %105 = tpu.dynamic_rotate %85 by %c241_i32_40 dim 1 : vector<4x256xf32>, i32 -> vector<4x256xf32>
    %c0_i32_41 = arith.constant 0 : i32
    %106 = vector.broadcast %c0_i32_41 : i32 to vector<1x256xi32>
    %107 = arith.cmpi eq, %103, %106 : vector<1x256xi32>
    %108 = vector.shape_cast %107 : vector<1x256xi1> to vector<1x256xi1>
    %109 = vector.broadcast %108 : vector<1x256xi1> to vector<4x256xi1>
    %110 = arith.select %109, %105, %104 : vector<4x256xi1>, vector<4x256xf32>
    %c255_i32_42 = arith.constant 255 : i32
    %111 = tpu.dynamic_rotate %85 by %c255_i32_42 dim 1 : vector<4x256xf32>, i32 -> vector<4x256xf32>
    %c15_i32_43 = arith.constant 15 : i32
    %112 = tpu.dynamic_rotate %85 by %c15_i32_43 dim 1 : vector<4x256xf32>, i32 -> vector<4x256xf32>
    %c15_i32_44 = arith.constant 15 : i32
    %113 = vector.broadcast %c15_i32_44 : i32 to vector<1x256xi32>
    %114 = arith.cmpi eq, %103, %113 : vector<1x256xi32>
    %115 = vector.shape_cast %114 : vector<1x256xi1> to vector<1x256xi1>
    %116 = vector.broadcast %115 : vector<1x256xi1> to vector<4x256xi1>
    %117 = arith.select %116, %112, %111 : vector<4x256xi1>, vector<4x256xf32>
    %c16_i32_45 = arith.constant 16 : i32
    %118 = tpu.dynamic_rotate %110 by %c16_i32_45 dim 1 : vector<4x256xf32>, i32 -> vector<4x256xf32>
    %c16_i32_46 = arith.constant 16 : i32
    %119 = vector.broadcast %c16_i32_46 : i32 to vector<1x256xi32>
    %120 = arith.cmpi slt, %87, %119 : vector<1x256xi32>
    %121 = vector.shape_cast %120 : vector<1x256xi1> to vector<1x256xi1>
    %122 = vector.broadcast %121 : vector<1x256xi1> to vector<4x256xi1>
    %123 = arith.select %122, %86, %118 : vector<4x256xi1>, vector<4x256xf32>
    %c16_i32_47 = arith.constant 16 : i32
    %124 = tpu.dynamic_rotate %85 by %c16_i32_47 dim 1 : vector<4x256xf32>, i32 -> vector<4x256xf32>
    %c16_i32_48 = arith.constant 16 : i32
    %125 = vector.broadcast %c16_i32_48 : i32 to vector<1x256xi32>
    %126 = arith.cmpi slt, %87, %125 : vector<1x256xi32>
    %127 = vector.shape_cast %126 : vector<1x256xi1> to vector<1x256xi1>
    %128 = vector.broadcast %127 : vector<1x256xi1> to vector<4x256xi1>
    %129 = arith.select %128, %86, %124 : vector<4x256xi1>, vector<4x256xf32>
    %c16_i32_49 = arith.constant 16 : i32
    %130 = tpu.dynamic_rotate %117 by %c16_i32_49 dim 1 : vector<4x256xf32>, i32 -> vector<4x256xf32>
    %c16_i32_50 = arith.constant 16 : i32
    %131 = vector.broadcast %c16_i32_50 : i32 to vector<1x256xi32>
    %132 = arith.cmpi slt, %87, %131 : vector<1x256xi32>
    %133 = vector.shape_cast %132 : vector<1x256xi1> to vector<1x256xi1>
    %134 = vector.broadcast %133 : vector<1x256xi1> to vector<4x256xi1>
    %135 = arith.select %134, %86, %130 : vector<4x256xi1>, vector<4x256xf32>
    %c240_i32_51 = arith.constant 240 : i32
    %136 = tpu.dynamic_rotate %110 by %c240_i32_51 dim 1 : vector<4x256xf32>, i32 -> vector<4x256xf32>
    %c240_i32_52 = arith.constant 240 : i32
    %137 = vector.broadcast %c240_i32_52 : i32 to vector<1x256xi32>
    %138 = arith.cmpi sge, %87, %137 : vector<1x256xi32>
    %139 = vector.shape_cast %138 : vector<1x256xi1> to vector<1x256xi1>
    %140 = vector.broadcast %139 : vector<1x256xi1> to vector<4x256xi1>
    %141 = arith.select %140, %86, %136 : vector<4x256xi1>, vector<4x256xf32>
    %c240_i32_53 = arith.constant 240 : i32
    %142 = tpu.dynamic_rotate %85 by %c240_i32_53 dim 1 : vector<4x256xf32>, i32 -> vector<4x256xf32>
    %c240_i32_54 = arith.constant 240 : i32
    %143 = vector.broadcast %c240_i32_54 : i32 to vector<1x256xi32>
    %144 = arith.cmpi sge, %87, %143 : vector<1x256xi32>
    %145 = vector.shape_cast %144 : vector<1x256xi1> to vector<1x256xi1>
    %146 = vector.broadcast %145 : vector<1x256xi1> to vector<4x256xi1>
    %147 = arith.select %146, %86, %142 : vector<4x256xi1>, vector<4x256xf32>
    %c240_i32_55 = arith.constant 240 : i32
    %148 = tpu.dynamic_rotate %117 by %c240_i32_55 dim 1 : vector<4x256xf32>, i32 -> vector<4x256xf32>
    %c240_i32_56 = arith.constant 240 : i32
    %149 = vector.broadcast %c240_i32_56 : i32 to vector<1x256xi32>
    %150 = arith.cmpi sge, %87, %149 : vector<1x256xi32>
    %151 = vector.shape_cast %150 : vector<1x256xi1> to vector<1x256xi1>
    %152 = vector.broadcast %151 : vector<1x256xi1> to vector<4x256xi1>
    %153 = arith.select %152, %86, %148 : vector<4x256xi1>, vector<4x256xf32>
    %154 = tpu.concatenate %123, %129, %135, %110, %85, %117, %141, %147, %153 in 0 : vector<4x256xf32>, vector<4x256xf32>, vector<4x256xf32>, vector<4x256xf32>, vector<4x256xf32>, vector<4x256xf32>, vector<4x256xf32>, vector<4x256xf32>, vector<4x256xf32> -> vector<36x256xf32>
    %c0_57 = arith.constant 0 : index
    %c0_58 = arith.constant 0 : index
    %155 = vector.load %arg6[%c0_57, %c0_58] : memref<4x36xf32, #tpu.memory_space<vmem>>, vector<4x36xf32>
    %cst_59 = arith.constant dense<0.000000e+00> : vector<4x256xf32>
    %156 = tpu.matmul %155, %154, %cst_59 {dimension_numbers = #tpu.dot_dimension_numbers<[1], [0], [0], [1], [0, 0, 1, 1], [], []>} : vector<4x36xf32>, vector<36x256xf32>, vector<4x256xf32> -> vector<4x256xf32>
    %c0_60 = arith.constant 0 : index
    %c0_61 = arith.constant 0 : index
    %157 = vector.load %arg7[%c0_60, %c0_61] : memref<4x1xf32, #tpu.memory_space<vmem>>, vector<4x1xf32>
    %158 = vector.broadcast %157 : vector<4x1xf32> to vector<4x256xf32>
    %159 = arith.addf %156, %158 : vector<4x256xf32>
    %cst_62 = arith.constant 0.000000e+00 : f32
    %160 = vector.broadcast %cst_62 : f32 to vector<4x256xf32>
    %161 = arith.cmpf ogt, %159, %160 : vector<4x256xf32>
    %cst_63 = arith.constant 0.00999999977 : f32
    %162 = vector.broadcast %cst_63 : f32 to vector<4x256xf32>
    %163 = arith.mulf %162, %159 : vector<4x256xf32>
    %164 = arith.select %161, %159, %163 : vector<4x256xi1>, vector<4x256xf32>
    %c0_64 = arith.constant 0 : index
    %c0_65 = arith.constant 0 : index
    %c0_66 = arith.constant 0 : index
    %165 = vector.load %arg8[%c0_64, %c0_65, %c0_66] : memref<1x4x256xf32, #tpu.memory_space<vmem>>, vector<1x4x256xf32>
    %166 = vector.shape_cast %165 : vector<1x4x256xf32> to vector<4x256xf32>
    %167 = vector.shape_cast %164 : vector<4x256xf32> to vector<1x4x256xf32>
    tpu.vector_store %arg8[%c0_64, %c0_65, %c0_66], %167 {strides = array<i32>} : memref<1x4x256xf32, #tpu.memory_space<vmem>>, vector<1x4x256xf32>,
    return
  }
  func.func @transform_0(%arg0: i32) -> (i32, i32) {
    %c0_i32 = arith.constant 0 : i32
    %c0_i32_0 = arith.constant 0 : i32
    %c0_i32_1 = arith.constant 0 : i32
    return %c0_i32, %c0_i32_0 : i32, i32
  }
  func.func @transform_1(%arg0: i32) -> (i32, i32, i32) {
    %c0_i32 = arith.constant 0 : i32
    %c0_i32_0 = arith.constant 0 : i32
    %c0_i32_1 = arith.constant 0 : i32
    return %arg0, %c0_i32, %c0_i32_0 : i32, i32, i32
  }
  func.func @transform_2(%arg0: i32) -> (i32, i32, i32) {
    %c0_i32 = arith.constant 0 : i32
    %c0_i32_0 = arith.constant 0 : i32
    %c0_i32_1 = arith.constant 0 : i32
    return %arg0, %c0_i32, %c0_i32_0 : i32, i32, i32
  }
  func.func @transform_3(%arg0: i32) -> (i32, i32) {
    %c0_i32 = arith.constant 0 : i32
    %c0_i32_0 = arith.constant 0 : i32
    %c0_i32_1 = arith.constant 0 : i32
    return %c0_i32, %c0_i32_0 : i32, i32
  }
  func.func @transform_4(%arg0: i32) -> (i32, i32) {
    %c0_i32 = arith.constant 0 : i32
    %c0_i32_0 = arith.constant 0 : i32
    %c0_i32_1 = arith.constant 0 : i32
    return %c0_i32, %c0_i32_0 : i32, i32
  }
  func.func @transform_5(%arg0: i32) -> (i32, i32) {
    %c0_i32 = arith.constant 0 : i32
    %c0_i32_0 = arith.constant 0 : i32
    %c0_i32_1 = arith.constant 0 : i32
    return %c0_i32, %c0_i32_0 : i32, i32
  }
  func.func @transform_6(%arg0: i32) -> (i32, i32) {
    %c0_i32 = arith.constant 0 : i32
    %c0_i32_0 = arith.constant 0 : i32
    %c0_i32_1 = arith.constant 0 : i32
    return %c0_i32, %c0_i32_0 : i32, i32
  }
  func.func @transform_7(%arg0: i32) -> (i32, i32, i32) {
    %c0_i32 = arith.constant 0 : i32
    %c0_i32_0 = arith.constant 0 : i32
    %c0_i32_1 = arith.constant 0 : i32
    return %arg0, %c0_i32, %c0_i32_0 : i32, i32, i32
  }
}

</mosaic_0001>

<llo_original>
// kernel: up_forward.1
$region0: #{up_forward.1}
  #allocation0 [shape = 'u32[]', space=smem, size = 0x4, offset = 0x4, fixed_abs, tag = 'smem constant byte address 0x4 - core index']
  #allocation1 [shape = 'u32[72,128]{1,0:T(1,128)}', space=vmem, size = 0x9000, scoped, tag = 'internal scratch']
  %s0 = inlined_call_operand.vmem [shape: f32[64,256], index: 0, kind: input, shape index: {}]
  %s1 = inlined_call_operand.vmem [shape: f32[2,4,64], index: 1, kind: input, shape index: {}]
  %s2 = inlined_call_operand.vmem [shape: f32[2,4,256], index: 2, kind: input, shape index: {}]
  %s3 = inlined_call_operand.vmem [shape: f32[4,72], index: 3, kind: input, shape index: {}]
  %s4 = inlined_call_operand.vmem [shape: f32[4,1], index: 4, kind: input, shape index: {}]
  %s5 = inlined_call_operand.vmem [shape: f32[4,36], index: 5, kind: input, shape index: {}]
  %s6 = inlined_call_operand.vmem [shape: f32[4,1], index: 6, kind: input, shape index: {}]
  %s7 = inlined_call_operand.vmem [shape: f32[2,4,256], index: 7, kind: output, shape index: {}]
  %s8 = sld [smem:[#allocation0]]
  $region61: #{up_forward.1} parent=0
    _
  %s10 = ssub.s32 1, %s8
  %s11 = scalar_select 0, %s10, %s8
  loop: start=0, step=1, limit=4
  $region2: #{up_forward.1} parent=0 // loop_pre_header
    _
  $region3: #{up_forward.1} parent=0 // loop_header
    %s13 = sphi 0, %s17
    %p14 = scmp.ge.s32.totalorder %s13, 4
    %s21 = sphi 0, %s21
    %s23 = sphi 0, %s21
    %s24 = sphi 0, %s23
    %s38 = sphi 0, %s24
    %s44 = sphi 0, %s46
    %s47 = sphi 0, %s44
    %s48 = sphi 0, %s47
    %s64 = sphi 0, %s48
    %s70 = sphi 0, %s72
    %s73 = sphi 0, %s70
    %s74 = sphi 0, %s73
    %s90 = sphi 0, %s74
    %s94 = sphi 0, %s94
    %s96 = sphi 0, %s94
    %s97 = sphi 0, %s96
    %s111 = sphi 0, %s97
    %s115 = sphi 0, %s115
    %s117 = sphi 0, %s115
    %s118 = sphi 0, %s117
    %s132 = sphi 0, %s118
    %s136 = sphi 0, %s136
    %s138 = sphi 0, %s136
    %s139 = sphi 0, %s138
    %s153 = sphi 0, %s139
    %s157 = sphi 0, %s157
    %s159 = sphi 0, %s157
    %s160 = sphi 0, %s159
    %s174 = sphi 0, %s160
    %s180 = sphi 0, %s182
    %s183 = sphi 0, %s180
    %s184 = sphi 0, %s183
    %s200 = sphi 0, %s184
  $region4: #{up_forward.1} parent=0 // loop_header_branch
    %16 = sbr.rel (%p14) target = $region8
  $region5: #{up_forward.1} parent=0 // loop_body
    %s18 = ssub.s32 %s13, 1
    %s19 = ssub.s32 %s13, 2
    %s20 = sadd.s32 %s13, 1
    %s22 = sadd.s32 %s21, 1
    %p25 = scmp.eq.s32.totalorder %s13, 1
    %p26 = scmp.ne.s32.totalorder %s21, %s23
    %p27 = scmp.eq.s32.totalorder %s13, 0
    %p28 = por %p26, %p27
    %p29 = scmp.ne.s32.totalorder %s21, %s23
    %p30 = scmp.eq.s32.totalorder %s18, 1
    %p31 = por %p29, %p30
    %p32 = scmp.ne.s32.totalorder %s23, %s24
    %p33 = scmp.eq.s32.totalorder %s18, 0
    %p34 = por %p32, %p33
    %p35 = scmp.ne.s32.totalorder %s23, %s24
    %p36 = scmp.eq.s32.totalorder %s19, 1
    %p37 = por %p35, %p36
    %p39 = scmp.ne.s32.totalorder %s24, %s38
    %p40 = scmp.eq.s32.totalorder %s19, 0
    %p41 = por %p39, %p40
    %s42 = ssub.s32 %s13, %s20
    %p43 = scmp.eq.s32.totalorder %s42, 0
    %s45 = sadd.s32 %s44, 1
    %s46 = scalar_select %p43, %s44, %s45
    %p49 = pneg %p43
    %p50 = scmp.eq.s32.totalorder %s13, 1
    %p51 = por %p49, %p50
    %p52 = scmp.ne.s32.totalorder %s44, %s47
    %p53 = scmp.eq.s32.totalorder %s13, 0
    %p54 = por %p52, %p53
    %p55 = scmp.ne.s32.totalorder %s44, %s47
    %p56 = scmp.eq.s32.totalorder %s18, 1
    %p57 = por %p55, %p56
    %p58 = scmp.ne.s32.totalorder %s47, %s48
    %p59 = scmp.eq.s32.totalorder %s18, 0
    %p60 = por %p58, %p59
    %p61 = scmp.ne.s32.totalorder %s47, %s48
    %p62 = scmp.eq.s32.totalorder %s19, 1
    %p63 = por %p61, %p62
    %p65 = scmp.ne.s32.totalorder %s48, %s64
    %p66 = scmp.eq.s32.totalorder %s19, 0
    %p67 = por %p65, %p66
    %s68 = ssub.s32 %s13, %s20
    %p69 = scmp.eq.s32.totalorder %s68, 0
    %s71 = sadd.s32 %s70, 1
    %s72 = scalar_select %p69, %s70, %s71
    %p75 = pneg %p69
    %p76 = scmp.eq.s32.totalorder %s13, 1
    %p77 = por %p75, %p76
    %p78 = scmp.ne.s32.totalorder %s70, %s73
    %p79 = scmp.eq.s32.totalorder %s13, 0
    %p80 = por %p78, %p79
    %p81 = scmp.ne.s32.totalorder %s70, %s73
    %p82 = scmp.eq.s32.totalorder %s18, 1
    %p83 = por %p81, %p82
    %p84 = scmp.ne.s32.totalorder %s73, %s74
    %p85 = scmp.eq.s32.totalorder %s18, 0
    %p86 = por %p84, %p85
    %p87 = scmp.ne.s32.totalorder %s73, %s74
    %p88 = scmp.eq.s32.totalorder %s19, 1
    %p89 = por %p87, %p88
    %p91 = scmp.ne.s32.totalorder %s74, %s90
    %p92 = scmp.eq.s32.totalorder %s19, 0
    %p93 = por %p91, %p92
    %s95 = sadd.s32 %s94, 1
    %p98 = scmp.eq.s32.totalorder %s13, 1
    %p99 = scmp.ne.s32.totalorder %s94, %s96
    %p100 = scmp.eq.s32.totalorder %s13, 0
    %p101 = por %p99, %p100
    %p102 = scmp.ne.s32.totalorder %s94, %s96
    %p103 = scmp.eq.s32.totalorder %s18, 1
    %p104 = por %p102, %p103
    %p105 = scmp.ne.s32.totalorder %s96, %s97
    %p106 = scmp.eq.s32.totalorder %s18, 0
    %p107 = por %p105, %p106
    %p108 = scmp.ne.s32.totalorder %s96, %s97
    %p109 = scmp.eq.s32.totalorder %s19, 1
    %p110 = por %p108, %p109
    %p112 = scmp.ne.s32.totalorder %s97, %s111
    %p113 = scmp.eq.s32.totalorder %s19, 0
    %p114 = por %p112, %p113
    %s116 = sadd.s32 %s115, 1
    %p119 = scmp.eq.s32.totalorder %s13, 1
    %p120 = scmp.ne.s32.totalorder %s115, %s117
    %p121 = scmp.eq.s32.totalorder %s13, 0
    %p122 = por %p120, %p121
    %p123 = scmp.ne.s32.totalorder %s115, %s117
    %p124 = scmp.eq.s32.totalorder %s18, 1
    %p125 = por %p123, %p124
    %p126 = scmp.ne.s32.totalorder %s117, %s118
    %p127 = scmp.eq.s32.totalorder %s18, 0
    %p128 = por %p126, %p127
    %p129 = scmp.ne.s32.totalorder %s117, %s118
    %p130 = scmp.eq.s32.totalorder %s19, 1
    %p131 = por %p129, %p130
    %p133 = scmp.ne.s32.totalorder %s118, %s132
    %p134 = scmp.eq.s32.totalorder %s19, 0
    %p135 = por %p133, %p134
    %s137 = sadd.s32 %s136, 1
    %p140 = scmp.eq.s32.totalorder %s13, 1
    %p141 = scmp.ne.s32.totalorder %s136, %s138
    %p142 = scmp.eq.s32.totalorder %s13, 0
    %p143 = por %p141, %p142
    %p144 = scmp.ne.s32.totalorder %s136, %s138
    %p145 = scmp.eq.s32.totalorder %s18, 1
    %p146 = por %p144, %p145
    %p147 = scmp.ne.s32.totalorder %s138, %s139
    %p148 = scmp.eq.s32.totalorder %s18, 0
    %p149 = por %p147, %p148
    %p150 = scmp.ne.s32.totalorder %s138, %s139
    %p151 = scmp.eq.s32.totalorder %s19, 1
    %p152 = por %p150, %p151
    %p154 = scmp.ne.s32.totalorder %s139, %s153
    %p155 = scmp.eq.s32.totalorder %s19, 0
    %p156 = por %p154, %p155
    %s158 = sadd.s32 %s157, 1
    %p161 = scmp.eq.s32.totalorder %s13, 1
    %p162 = scmp.ne.s32.totalorder %s157, %s159
    %p163 = scmp.eq.s32.totalorder %s13, 0
    %p164 = por %p162, %p163
    %p165 = scmp.ne.s32.totalorder %s157, %s159
    %p166 = scmp.eq.s32.totalorder %s18, 1
    %p167 = por %p165, %p166
    %p168 = scmp.ne.s32.totalorder %s159, %s160
    %p169 = scmp.eq.s32.totalorder %s18, 0
    %p170 = por %p168, %p169
    %p171 = scmp.ne.s32.totalorder %s159, %s160
    %p172 = scmp.eq.s32.totalorder %s19, 1
    %p173 = por %p171, %p172
    %p175 = scmp.ne.s32.totalorder %s160, %s174
    %p176 = scmp.eq.s32.totalorder %s19, 0
    %p177 = por %p175, %p176
    %s178 = ssub.s32 %s13, %s20
    %p179 = scmp.eq.s32.totalorder %s178, 0
    %s181 = sadd.s32 %s180, 1
    %s182 = scalar_select %p179, %s180, %s181
    %p185 = pneg %p179
    %p186 = scmp.eq.s32.totalorder %s13, 1
    %p187 = por %p185, %p186
    %p188 = scmp.ne.s32.totalorder %s180, %s183
    %p189 = scmp.eq.s32.totalorder %s13, 0
    %p190 = por %p188, %p189
    %p191 = scmp.ne.s32.totalorder %s180, %s183
    %p192 = scmp.eq.s32.totalorder %s18, 1
    %p193 = por %p191, %p192
    %p194 = scmp.ne.s32.totalorder %s183, %s184
    %p195 = scmp.eq.s32.totalorder %s18, 0
    %p196 = por %p194, %p195
    %p197 = scmp.ne.s32.totalorder %s183, %s184
    %p198 = scmp.eq.s32.totalorder %s19, 1
    %p199 = por %p197, %p198
    %p201 = scmp.ne.s32.totalorder %s184, %s200
    %p202 = scmp.eq.s32.totalorder %s19, 0
    %p203 = por %p201, %p202
    %p204 = scmp.le.s32.totalorder 1, %s13
    %p205 = scmp.lt.s32.totalorder %s13, 3
    %p206 = pnand %p204, %p205
    %p207 = pneg %p206
    // Predicated region
    $region9: #{up_forward.1} parent=5 // pred_check
      _
    $region10: #{up_forward.1} parent=5 // pred_check_branch
      %209 = sbr.rel (%p206) target = $region12
    $region11: #{up_forward.1} parent=5 // pred_region
      %s210 = ssub.s32 %s13, 1
      // Predicated region
      $region13: #{up_forward.1} parent=11 // pred_check
        %p211 = pneg %p34
      $region14: #{up_forward.1} parent=11 // pred_check_branch
        %213 = sbr.rel (%p211) target = $region16
      $region15: #{up_forward.1} parent=11 // pred_region
        _
      $region16: #{up_forward.1} parent=11 // pred_fallthru
        _
      // Predicated region
      $region17: #{up_forward.1} parent=11 // pred_check
        %p214 = pneg %p107
      $region18: #{up_forward.1} parent=11 // pred_check_branch
        %216 = sbr.rel (%p214) target = $region20
      $region19: #{up_forward.1} parent=11 // pred_region
        _
      $region20: #{up_forward.1} parent=11 // pred_fallthru
        _
      // Predicated region
      $region21: #{up_forward.1} parent=11 // pred_check
        %p217 = pneg %p128
      $region22: #{up_forward.1} parent=11 // pred_check_branch
        %219 = sbr.rel (%p217) target = $region24
      $region23: #{up_forward.1} parent=11 // pred_region
        _
      $region24: #{up_forward.1} parent=11 // pred_fallthru
        _
      // Predicated region
      $region25: #{up_forward.1} parent=11 // pred_check
        %p220 = pneg %p149
      $region26: #{up_forward.1} parent=11 // pred_check_branch
        %222 = sbr.rel (%p220) target = $region28
      $region27: #{up_forward.1} parent=11 // pred_region
        _
      $region28: #{up_forward.1} parent=11 // pred_fallthru
        _
      // Predicated region
      $region29: #{up_forward.1} parent=11 // pred_check
        %p223 = pneg %p170
      $region30: #{up_forward.1} parent=11 // pred_check_branch
        %225 = sbr.rel (%p223) target = $region32
      $region31: #{up_forward.1} parent=11 // pred_region
        _
      $region32: #{up_forward.1} parent=11 // pred_fallthru
        _
    $region12: #{up_forward.1} parent=5 // pred_fallthru
      _
    %p226 = scmp.lt.s32.totalorder %s13, 2
    // Predicated region
    $region33: #{up_forward.1} parent=5 // pred_check
      %p227 = pneg %p226
    $region34: #{up_forward.1} parent=5 // pred_check_branch
      %229 = sbr.rel (%p227) target = $region36
    $region35: #{up_forward.1} parent=5 // pred_region
      // Predicated region
      $region37: #{up_forward.1} parent=35 // pred_check
        %p230 = pneg %p54
      $region38: #{up_forward.1} parent=35 // pred_check_branch
        %232 = sbr.rel (%p230) target = $region40
      $region39: #{up_forward.1} parent=35 // pred_region
        %p233 = scmp.lt.s32.totalorder %s13, 1
        %s234 = scalar_select %p233, %s13, 1
        %s235 = smul.addr %s234, 4
        %s236 = scalar_lea.vmem %s1, %s235
      $region40: #{up_forward.1} parent=35 // pred_fallthru
        _
      // Predicated region
      $region41: #{up_forward.1} parent=35 // pred_check
        %p237 = pneg %p80
      $region42: #{up_forward.1} parent=35 // pred_check_branch
        %239 = sbr.rel (%p237) target = $region44
      $region43: #{up_forward.1} parent=35 // pred_region
        %p240 = scmp.lt.s32.totalorder %s13, 1
        %s241 = scalar_select %p240, %s13, 1
        %s242 = smul.addr %s241, 2
        %s243 = smul.addr %s242, 4
        %s244 = scalar_lea.vmem %s2, %s243
      $region44: #{up_forward.1} parent=35 // pred_fallthru
        _
    $region36: #{up_forward.1} parent=5 // pred_fallthru
      _
    %p245 = scmp.le.s32.totalorder 1, %s13
    %p246 = scmp.lt.s32.totalorder %s13, 3
    %p247 = pnand %p245, %p246
    %p248 = pneg %p247
    // Predicated region
    $region45: #{up_forward.1} parent=5 // pred_check
      _
    $region46: #{up_forward.1} parent=5 // pred_check_branch
      %250 = sbr.rel (%p247) target = $region48
    $region47: #{up_forward.1} parent=5 // pred_region
      %s251 = ssub.s32 %s13, 1
      %p252 = pneg %p34
      %p253 = pneg %p31
      %p254 = scmp.lt.s32.totalorder %s18, 1
      %s255 = scalar_select %p254, %s18, 1
      %s256 = smul.addr %s255, 4
      %s257 = scalar_lea.vmem %s1, %s256
      %p258 = pneg %p60
      %p259 = pneg %p57
      %p260 = scmp.lt.s32.totalorder %s18, 1
      %s261 = scalar_select %p260, %s18, 1
      %s262 = smul.addr %s261, 2
      %s263 = smul.addr %s262, 4
      %s264 = scalar_lea.vmem %s2, %s263
      %p265 = pneg %p86
      %p266 = pneg %p83
      %p267 = pneg %p107
      %p268 = pneg %p104
      %p269 = pneg %p128
      %p270 = pneg %p125
      %p271 = pneg %p149
      %p272 = pneg %p146
      %p273 = pneg %p170
      %p274 = pneg %p167
      %p275 = pneg %p196
      %p276 = pneg %p193
      %p277 = scmp.lt.s32.totalorder %s18, 1
      %s278 = scalar_select %p277, %s18, 1
      %s279 = smul.addr %s278, 2
      %s280 = smul.addr %s279, 4
      %s281 = scalar_lea.vmem %s7, %s280
      %p282 = scmp.lt.s32.totalorder %s18, 1
      %s283 = scalar_select %p282, %s18, 1
      %s284 = smul.addr %s283, 4
      %s285 = scalar_lea.vmem %s1, %s284
      %p286 = scmp.lt.s32.totalorder %s18, 1
      %s287 = scalar_select %p286, %s18, 1
      %s288 = smul.addr %s287, 2
      %s289 = smul.addr %s288, 4
      %s290 = scalar_lea.vmem %s2, %s289
      %p291 = scmp.lt.s32.totalorder %s18, 1
      %s292 = scalar_select %p291, %s18, 1
      %s293 = smul.addr %s292, 2
      %s294 = smul.addr %s293, 4
      %s295 = scalar_lea.vmem %s7, %s294
      %v296 = vld [vmem:[%s285] sm:$0xf]
      %v297 = vld [vmem:[%s0] sm:$0xff]
      %v298 = vld [vmem:[%s0 + $0x8] sm:$0xff]
      %v299 = vld [vmem:[%s0 + $0x10] sm:$0xff]
      %v300 = vld [vmem:[%s0 + $0x18] sm:$0xff]
      %v301 = vld [vmem:[%s0 + $0x20] sm:$0xff]
      %v302 = vld [vmem:[%s0 + $0x28] sm:$0xff]
      %v303 = vld [vmem:[%s0 + $0x30] sm:$0xff]
      %v304 = vld [vmem:[%s0 + $0x38] sm:$0xff]
      %v305 = vld [vmem:[%s0 + $0x40] sm:$0xff]
      %v306 = vld [vmem:[%s0 + $0x48] sm:$0xff]
      %v307 = vld [vmem:[%s0 + $0x50] sm:$0xff]
      %v308 = vld [vmem:[%s0 + $0x58] sm:$0xff]
      %v309 = vld [vmem:[%s0 + $0x60] sm:$0xff]
      %v310 = vld [vmem:[%s0 + $0x68] sm:$0xff]
      %v311 = vld [vmem:[%s0 + $0x70] sm:$0xff]
      %v312 = vld [vmem:[%s0 + $0x78] sm:$0xff]
      %vm313 = vcmask 523264
      %v315 = vsel %vm313, %v296, 0
      %317 = vmatpush.msra.mxu0 0.0
      %318 = vmatpush.msra.mxu0 0.0
      %319 = vmatpush.msra.mxu0 0.0
      %320 = vmatpush.msra.mxu0 0.0
      %321 = vmatpush.msra.mxu0 0.0
      %322 = vmatpush.msra.mxu0 0.0
      %323 = vmatpush.msra.mxu0 0.0
      %324 = vmatpush.msra.mxu0 0.0
      %325 = vmatpush.msra.mxu0 %v311
      %326 = vmatpush.msra.mxu0 %v309
      %327 = vmatpush.msra.mxu0 %v307
      %328 = vmatpush.msra.mxu0 %v305
      %329 = vmatpush.msra.mxu0 %v303
      %330 = vmatpush.msra.mxu0 %v301
      %331 = vmatpush.msra.mxu0 %v299
      %332 = vmatpush.msra.mxu0 %v297
      %333 = vmatmul.f32.gmra.mxu0 %v315
      %v334 = vpop.f32.mrf.mxu0
      %v335 = vadd.f32 0.0, %v334
      %336 = vdwg.mxu0
      %337 = vmatpush.msra.mxu0 0.0
      %338 = vmatpush.msra.mxu0 0.0
      %339 = vmatpush.msra.mxu0 0.0
      %340 = vmatpush.msra.mxu0 0.0
      %341 = vmatpush.msra.mxu0 0.0
      %342 = vmatpush.msra.mxu0 0.0
      %343 = vmatpush.msra.mxu0 0.0
      %344 = vmatpush.msra.mxu0 0.0
      %345 = vmatpush.msra.mxu0 %v312
      %346 = vmatpush.msra.mxu0 %v310
      %347 = vmatpush.msra.mxu0 %v308
      %348 = vmatpush.msra.mxu0 %v306
      %349 = vmatpush.msra.mxu0 %v304
      %350 = vmatpush.msra.mxu0 %v302
      %351 = vmatpush.msra.mxu0 %v300
      %352 = vmatpush.msra.mxu0 %v298
      %353 = vmatmul.f32.gmra.mxu0 %v315
      %v354 = vpop.f32.mrf.mxu0
      %v355 = vadd.f32 0.0, %v354
      %356 = vdwg.mxu0
      %v357 = vld [vmem:[%s290] sm:$0xff]
      %359 = vst [vmem:[#allocation1] ss:$2 sm:$0xff] %v357
      %v360 = vld.sshfl [vmem:[#allocation1] sm:$0xff pattern:$0x75316420]
      %v361 = vld.sshfl [vmem:[#allocation1 + $0x8] sm:$0xff pattern:$0x75316420]
      %v366 = vrot.slane %v335, 4
      %v367 = vrot.slane %v355, 4
      %vm370 = vcmask 1043456
      %v371 = vsel %vm370, %v360, %v366
      %v372 = vsel %vm370, %v361, %v367
      %v373 = vlaneseq
      %v374 = vand.u32 %v373, 127
      %v375 = vadd.s32 %v374, 128
      %vm376 = vcmp.lt.s32.totalorder %v374, 0
      %v377 = vsub.s32 0, %v374
      %v378 = vsel %vm376, %v377, %v374
      %v379 = vshrl.u32 %v378, 4
      %v380 = vand.u32 %v378, 15
      %v381 = vsub.s32 0, %v380
      %v382 = vsel %vm376, %v381, %v380
      %vm383 = vcmp.lt.s32.totalorder %v375, 0
      %v384 = vsub.s32 0, %v375
      %v385 = vsel %vm383, %v384, %v375
      %v386 = vshrl.u32 %v385, 4
      %v387 = vand.u32 %v385, 15
      %v388 = vsub.s32 0, %v387
      %v389 = vsel %vm383, %v388, %v387
      %vm390 = vcmp.ne.s32.totalorder %v382, 0
      %vm391 = vcmp.ne.s32.totalorder %v389, 0
      %vm392 = vcmp.lt.s32.totalorder %v382, 0
      %vm393 = vcmp.lt.s32.totalorder %v389, 0
      %vm394 = vmand %vm392, %vm390
      %vm395 = vmand %vm393, %vm391
      %v396 = vadd.s32 %v382, 16
      %v397 = vadd.s32 %v389, 16
      %v398 = vsel %vm394, %v396, %v382
      %v399 = vsel %vm395, %v397, %v389
      %400 = vrot.lane.b32.xlu0 %v371, 1
      %v401 = vpop.permute.xlu0 %400
      %402 = vrot.lane.b32.xlu0 %v372, 1
      %v403 = vpop.permute.xlu0 %402
      %vm404 = vcmp.lt.s32.totalorder %v374, 1
      %v405 = vsel %vm404, %v401, %v403
      %v406 = vsel %vm404, %v403, %v401
      %407 = vrot.lane.b32.xlu0 %v371, 113
      %v408 = vpop.permute.xlu0 %407
      %409 = vrot.lane.b32.xlu0 %v372, 113
      %v410 = vpop.permute.xlu0 %409
      %vm411 = vcmp.lt.s32.totalorder %v374, 113
      %v412 = vsel %vm411, %v408, %v410
      %v413 = vsel %vm411, %v410, %v408
      %vm414 = vcmp.eq.s32.totalorder %v398, 0
      %vm415 = vcmp.eq.s32.totalorder %v399, 0
      %v416 = vsel %vm414, 1, 0
      %v417 = vsel %vm415, 1, 0
      %vm418 = vcmp.eq.s32.totalorder %v416, 1
      %vm419 = vcmp.eq.s32.totalorder %v417, 1
      %v420 = vsel %vm418, %v412, %v406
      %v421 = vsel %vm419, %v413, %v405
      %422 = vrot.lane.b32.xlu0 %v371, 127
      %v423 = vpop.permute.xlu0 %422
      %424 = vrot.lane.b32.xlu0 %v372, 127
      %v425 = vpop.permute.xlu0 %424
      %vm426 = vcmp.lt.s32.totalorder %v374, 127
      %v427 = vsel %vm426, %v423, %v425
      %v428 = vsel %vm426, %v425, %v423
      %429 = vrot.lane.b32.xlu0 %v371, 15
      %v430 = vpop.permute.xlu0 %429
      %431 = vrot.lane.b32.xlu0 %v372, 15
      %v432 = vpop.permute.xlu0 %431
      %vm433 = vcmp.lt.s32.totalorder %v374, 15
      %v434 = vsel %vm433, %v430, %v432
      %v435 = vsel %vm433, %v432, %v430
      %vm436 = vcmp.eq.s32.totalorder %v398, 15
      %vm437 = vcmp.eq.s32.totalorder %v399, 15
      %v438 = vsel %vm436, 1, 0
      %v439 = vsel %vm437, 1, 0
      %vm440 = vcmp.eq.s32.totalorder %v438, 1
      %vm441 = vcmp.eq.s32.totalorder %v439, 1
      %v442 = vsel %vm440, %v435, %v427
      %v443 = vsel %vm441, %v434, %v428
      %444 = vrot.lane.b32.xlu0 %v420, 16
      %v445 = vpop.permute.xlu0 %444
      %446 = vrot.lane.b32.xlu0 %v421, 16
      %v447 = vpop.permute.xlu0 %446
      %vm448 = vcmp.lt.s32.totalorder %v374, 16
      %v449 = vsel %vm448, %v445, %v447
      %v450 = vsel %vm448, %v447, %v445
      %vm451 = vcmp.lt.s32.totalorder %v375, 16
      %v452 = vsel %vm448, 1, 0
      %v453 = vsel %vm451, 1, 0
      %vm454 = vcmp.eq.s32.totalorder %v452, 1
      %vm455 = vcmp.eq.s32.totalorder %v453, 1
      %v456 = vsel %vm454, 0.0, %v450
      %v457 = vsel %vm455, 0.0, %v449
      %458 = vrot.lane.b32.xlu0 %v371, 16
      %v459 = vpop.permute.xlu0 %458
      %460 = vrot.lane.b32.xlu0 %v372, 16
      %v461 = vpop.permute.xlu0 %460
      %v462 = vsel %vm448, %v459, %v461
      %v463 = vsel %vm448, %v461, %v459
      %v464 = vsel %vm454, 0.0, %v463
      %v465 = vsel %vm455, 0.0, %v462
      %466 = vrot.lane.b32.xlu0 %v442, 16
      %v467 = vpop.permute.xlu0 %466
      %468 = vrot.lane.b32.xlu0 %v443, 16
      %v469 = vpop.permute.xlu0 %468
      %v470 = vsel %vm448, %v467, %v469
      %v471 = vsel %vm448, %v469, %v467
      %v472 = vsel %vm454, 0.0, %v471
      %v473 = vsel %vm455, 0.0, %v470
      %474 = vrot.lane.b32.xlu0 %v420, 112
      %v475 = vpop.permute.xlu0 %474
      %476 = vrot.lane.b32.xlu0 %v421, 112
      %v477 = vpop.permute.xlu0 %476
      %vm478 = vcmp.lt.s32.totalorder %v374, 112
      %v479 = vsel %vm478, %v475, %v477
      %v480 = vsel %vm478, %v477, %v475
      %vm481 = vcmp.ge.s32.totalorder %v374, 240
      %vm482 = vcmp.ge.s32.totalorder %v375, 240
      %v483 = vsel %vm481, 1, 0
      %v484 = vsel %vm482, 1, 0
      %vm485 = vcmp.eq.s32.totalorder %v483, 1
      %vm486 = vcmp.eq.s32.totalorder %v484, 1
      %v487 = vsel %vm485, 0.0, %v479
      %v488 = vsel %vm486, 0.0, %v480
      %489 = vrot.lane.b32.xlu0 %v371, 112
      %v490 = vpop.permute.xlu0 %489
      %491 = vrot.lane.b32.xlu0 %v372, 112
      %v492 = vpop.permute.xlu0 %491
      %v493 = vsel %vm478, %v490, %v492
      %v494 = vsel %vm478, %v492, %v490
      %v495 = vsel %vm485, 0.0, %v493
      %v496 = vsel %vm486, 0.0, %v494
      %497 = vrot.lane.b32.xlu0 %v442, 112
      %v498 = vpop.permute.xlu0 %497
      %499 = vrot.lane.b32.xlu0 %v443, 112
      %v500 = vpop.permute.xlu0 %499
      %v501 = vsel %vm478, %v498, %v500
      %v502 = vsel %vm478, %v500, %v498
      %v503 = vsel %vm485, 0.0, %v501
      %v504 = vsel %vm486, 0.0, %v502
      %v505 = vld [vmem:[%s3] sm:$0xf]
      %v506 = vld [vmem:[%s4] sm:$0xf]
      %508 = vset.pattern.permute.xlu0 0
      %509 = vperm.xlu0 %508, %v506
      %v510 = vpop.permute.xlu0 %509
      %vm512 = vcmask 588800
      %v514 = vsel %vm512, %v505, 0
      %516 = vmatpush.msra.mxu0 0.0
      %517 = vmatpush.msra.mxu0 0.0
      %518 = vmatpush.msra.mxu0 0.0
      %519 = vmatpush.msra.mxu0 0.0
      %520 = vmatpush.msra.mxu0 0.0
      %521 = vmatpush.msra.mxu0 0.0
      %522 = vmatpush.msra.mxu0 0.0
      %523 = vmatpush.msra.mxu0 %v503
      %524 = vmatpush.msra.mxu0 %v495
      %525 = vmatpush.msra.mxu0 %v487
      %526 = vmatpush.msra.mxu0 %v442
      %527 = vmatpush.msra.mxu0 %v371
      %528 = vmatpush.msra.mxu0 %v420
      %529 = vmatpush.msra.mxu0 %v472
      %530 = vmatpush.msra.mxu0 %v464
      %531 = vmatpush.msra.mxu0 %v456
      %532 = vmatmul.f32.gmra.mxu0 %v514
      %v533 = vpop.f32.mrf.mxu0
      %v534 = vadd.f32 %v510, %v533
      %535 = vdwg.mxu0
      %536 = vmatpush.msra.mxu0 0.0
      %537 = vmatpush.msra.mxu0 0.0
      %538 = vmatpush.msra.mxu0 0.0
      %539 = vmatpush.msra.mxu0 0.0
      %540 = vmatpush.msra.mxu0 0.0
      %541 = vmatpush.msra.mxu0 0.0
      %542 = vmatpush.msra.mxu0 0.0
      %543 = vmatpush.msra.mxu0 %v504
      %544 = vmatpush.msra.mxu0 %v496
      %545 = vmatpush.msra.mxu0 %v488
      %546 = vmatpush.msra.mxu0 %v443
      %547 = vmatpush.msra.mxu0 %v372
      %548 = vmatpush.msra.mxu0 %v421
      %549 = vmatpush.msra.mxu0 %v473
      %550 = vmatpush.msra.mxu0 %v465
      %551 = vmatpush.msra.mxu0 %v457
      %552 = vmatmul.f32.gmra.mxu0 %v514
      %v553 = vpop.f32.mrf.mxu0
      %v554 = vadd.f32 %v510, %v553
      %555 = vdwg.mxu0
      %vm556 = vcmp.gt.f32.partialorder %v534, 0.0
      %vm557 = vcmp.gt.f32.partialorder %v554, 0.0
      %v558 = vmul.f32 %v534, 0.01
      %v559 = vmul.f32 %v554, 0.01
      %v560 = vsel %vm556, %v534, %v558
      %v561 = vsel %vm557, %v554, %v559
      %562 = vrot.lane.b32.xlu0 %v560, 1
      %v563 = vpop.permute.xlu0 %562
      %564 = vrot.lane.b32.xlu0 %v561, 1
      %v565 = vpop.permute.xlu0 %564
      %v566 = vsel %vm404, %v563, %v565
      %v567 = vsel %vm404, %v565, %v563
      %568 = vrot.lane.b32.xlu0 %v560, 113
      %v569 = vpop.permute.xlu0 %568
      %570 = vrot.lane.b32.xlu0 %v561, 113
      %v571 = vpop.permute.xlu0 %570
      %v572 = vsel %vm411, %v569, %v571
      %v573 = vsel %vm411, %v571, %v569
      %v574 = vsel %vm418, %v572, %v567
      %v575 = vsel %vm419, %v573, %v566
      %576 = vrot.lane.b32.xlu0 %v560, 127
      %v577 = vpop.permute.xlu0 %576
      %578 = vrot.lane.b32.xlu0 %v561, 127
      %v579 = vpop.permute.xlu0 %578
      %v580 = vsel %vm426, %v577, %v579
      %v581 = vsel %vm426, %v579, %v577
      %582 = vrot.lane.b32.xlu0 %v560, 15
      %v583 = vpop.permute.xlu0 %582
      %584 = vrot.lane.b32.xlu0 %v561, 15
      %v585 = vpop.permute.xlu0 %584
      %v586 = vsel %vm433, %v583, %v585
      %v587 = vsel %vm433, %v585, %v583
      %v588 = vsel %vm440, %v587, %v580
      %v589 = vsel %vm441, %v586, %v581
      %590 = vrot.lane.b32.xlu0 %v574, 16
      %v591 = vpop.permute.xlu0 %590
      %592 = vrot.lane.b32.xlu0 %v575, 16
      %v593 = vpop.permute.xlu0 %592
      %v594 = vsel %vm448, %v591, %v593
      %v595 = vsel %vm448, %v593, %v591
      %v596 = vsel %vm454, 0.0, %v595
      %v597 = vsel %vm455, 0.0, %v594
      %598 = vrot.lane.b32.xlu0 %v560, 16
      %v599 = vpop.permute.xlu0 %598
      %600 = vrot.lane.b32.xlu0 %v561, 16
      %v601 = vpop.permute.xlu0 %600
      %v602 = vsel %vm448, %v599, %v601
      %v603 = vsel %vm448, %v601, %v599
      %v604 = vsel %vm454, 0.0, %v603
      %v605 = vsel %vm455, 0.0, %v602
      %606 = vrot.lane.b32.xlu0 %v588, 16
      %v607 = vpop.permute.xlu0 %606
      %608 = vrot.lane.b32.xlu0 %v589, 16
      %v609 = vpop.permute.xlu0 %608
      %v610 = vsel %vm448, %v607, %v609
      %v611 = vsel %vm448, %v609, %v607
      %v612 = vsel %vm454, 0.0, %v611
      %v613 = vsel %vm455, 0.0, %v610
      %614 = vrot.lane.b32.xlu0 %v574, 112
      %v615 = vpop.permute.xlu0 %614
      %616 = vrot.lane.b32.xlu0 %v575, 112
      %v617 = vpop.permute.xlu0 %616
      %v618 = vsel %vm478, %v615, %v617
      %v619 = vsel %vm478, %v617, %v615
      %v620 = vsel %vm485, 0.0, %v618
      %v621 = vsel %vm486, 0.0, %v619
      %622 = vrot.lane.b32.xlu0 %v560, 112
      %v623 = vpop.permute.xlu0 %622
      %624 = vrot.lane.b32.xlu0 %v561, 112
      %v625 = vpop.permute.xlu0 %624
      %v626 = vsel %vm478, %v623, %v625
      %v627 = vsel %vm478, %v625, %v623
      %v628 = vsel %vm485, 0.0, %v626
      %v629 = vsel %vm486, 0.0, %v627
      %630 = vrot.lane.b32.xlu0 %v588, 112
      %v631 = vpop.permute.xlu0 %630
      %632 = vrot.lane.b32.xlu0 %v589, 112
      %v633 = vpop.permute.xlu0 %632
      %v634 = vsel %vm478, %v631, %v633
      %v635 = vsel %vm478, %v633, %v631
      %v636 = vsel %vm485, 0.0, %v634
      %v637 = vsel %vm486, 0.0, %v635
      %v640 = vrot.slane %v604, 4
      %v641 = vrot.slane %v605, 4
      %v646 = vrot.slane %v574, 4
      %v647 = vrot.slane %v575, 4
      %v652 = vrot.slane %v588, 4
      %v653 = vrot.slane %v589, 4
      %v658 = vrot.slane %v628, 4
      %v659 = vrot.slane %v629, 4
      %v662 = vsel %vm370, %v596, %v640
      %v663 = vsel %vm370, %v597, %v641
      %v664 = vsel %vm370, %v612, %v646
      %v665 = vsel %vm370, %v613, %v647
      %v666 = vsel %vm370, %v560, %v652
      %v667 = vsel %vm370, %v561, %v653
      %v668 = vsel %vm370, %v620, %v658
      %v669 = vsel %vm370, %v621, %v659
      %v670 = vld [vmem:[%s5] sm:$0xf]
      %v671 = vld [vmem:[%s6] sm:$0xf]
      %673 = vset.pattern.permute.xlu0 0
      %674 = vperm.xlu0 %673, %v671
      %v675 = vpop.permute.xlu0 %674
      %vm677 = vcmask 293888
      %v679 = vsel %vm677, %v670, 0
      %v682 = vsel %vm370, %v636, 0
      %v685 = vsel %vm370, %v637, 0
      %687 = vmatpush.msra.mxu0 0.0
      %688 = vmatpush.msra.mxu0 0.0
      %689 = vmatpush.msra.mxu0 0.0
      %690 = vmatpush.msra.mxu0 0.0
      %691 = vmatpush.msra.mxu0 0.0
      %692 = vmatpush.msra.mxu0 0.0
      %693 = vmatpush.msra.mxu0 0.0
      %694 = vmatpush.msra.mxu0 0.0
      %695 = vmatpush.msra.mxu0 0.0
      %696 = vmatpush.msra.mxu0 0.0
      %697 = vmatpush.msra.mxu0 0.0
      %698 = vmatpush.msra.mxu0 %v682
      %699 = vmatpush.msra.mxu0 %v668
      %700 = vmatpush.msra.mxu0 %v666
      %701 = vmatpush.msra.mxu0 %v664
      %702 = vmatpush.msra.mxu0 %v662
      %703 = vmatmul.f32.gmra.mxu0 %v679
      %v704 = vpop.f32.mrf.mxu0
      %v705 = vadd.f32 %v675, %v704
      %706 = vdwg.mxu0
      %707 = vmatpush.msra.mxu0 0.0
      %708 = vmatpush.msra.mxu0 0.0
      %709 = vmatpush.msra.mxu0 0.0
      %710 = vmatpush.msra.mxu0 0.0
      %711 = vmatpush.msra.mxu0 0.0
      %712 = vmatpush.msra.mxu0 0.0
      %713 = vmatpush.msra.mxu0 0.0
      %714 = vmatpush.msra.mxu0 0.0
      %715 = vmatpush.msra.mxu0 0.0
      %716 = vmatpush.msra.mxu0 0.0
      %717 = vmatpush.msra.mxu0 0.0
      %718 = vmatpush.msra.mxu0 %v685
      %719 = vmatpush.msra.mxu0 %v669
      %720 = vmatpush.msra.mxu0 %v667
      %721 = vmatpush.msra.mxu0 %v665
      %722 = vmatpush.msra.mxu0 %v663
      %723 = vmatmul.f32.gmra.mxu0 %v679
      %v724 = vpop.f32.mrf.mxu0
      %v725 = vadd.f32 %v675, %v724
      %726 = vdwg.mxu0
      %vm727 = vcmp.gt.f32.partialorder %v705, 0.0
      %vm728 = vcmp.gt.f32.partialorder %v725, 0.0
      %v729 = vmul.f32 %v705, 0.01
      %v730 = vmul.f32 %v725, 0.01
      %v731 = vsel %vm727, %v705, %v729
      %v732 = vsel %vm728, %v725, %v730
      %v735 = vrot.slane %v732, 4
      %v736 = vsel %vm370, %v731, %v735
      %738 = vst [vmem:[%s295] sm:$0xff] %v736
      %p739 = scmp.lt.s32.totalorder %s18, 1
      %s740 = scalar_select %p739, %s18, 1
      %s741 = smul.addr %s740, 2
      %s742 = smul.addr %s741, 4
      %s743 = scalar_lea.vmem %s7, %s742
      // Predicated region
      $region49: #{up_forward.1} parent=47 // pred_check
        %p744 = pneg %p193
      $region50: #{up_forward.1} parent=47 // pred_check_branch
        %746 = sbr.rel (%p744) target = $region52
      $region51: #{up_forward.1} parent=47 // pred_region
        _
      $region52: #{up_forward.1} parent=47 // pred_fallthru
        _
    $region48: #{up_forward.1} parent=5 // pred_fallthru
      _
    %p747 = scmp.le.s32.totalorder 2, %s13
    // Predicated region
    $region53: #{up_forward.1} parent=5 // pred_check
      %p748 = pneg %p747
    $region54: #{up_forward.1} parent=5 // pred_check_branch
      %750 = sbr.rel (%p748) target = $region56
    $region55: #{up_forward.1} parent=5 // pred_region
      %s751 = ssub.s32 %s13, 2
      // Predicated region
      $region57: #{up_forward.1} parent=55 // pred_check
        %p752 = pneg %p199
      $region58: #{up_forward.1} parent=55 // pred_check_branch
        %754 = sbr.rel (%p752) target = $region60
      $region59: #{up_forward.1} parent=55 // pred_region
        %p755 = scmp.lt.s32.totalorder %s19, 1
        %s756 = scalar_select %p755, %s19, 1
        %s757 = smul.addr %s756, 2
        %s758 = smul.addr %s757, 4
        %s759 = scalar_lea.vmem %s7, %s758
      $region60: #{up_forward.1} parent=55 // pred_fallthru
        _
    $region56: #{up_forward.1} parent=5 // pred_fallthru
      _
  $region6: #{up_forward.1} parent=0 // loop_footer
    %s17 = sadd.s32 1, %s13
  $region7: #{up_forward.1} parent=0 // loop_footer_branch
    %12 = sbr.rel target = $region3
  $region8: #{up_forward.1} parent=0 // loop_exit
    _

</llo_original>
